<compile_context>
chip_gen: v7x
topology: tpu7x:2x2x1
jax: 0.10.0
libtpu: 0.0.40
codegen_flags: <defaults>
</compile_context>

<pallas_src>
import functools
import math

import jax
import jax.numpy as jnp
from jax.experimental import pallas as pl
from jax.experimental.pallas import tpu as pltpu

LANES = 128


def _silog_partial_kernel(rows_total, tiles_per_core, tile_rows, chunk_rows,
                          pred_ref, target_ref, out_ref):
    c = pl.program_id(0)   # core-split axis (size 1 unless num_cores > 1)
    i = pl.program_id(1)   # sequential reduction axis

    # Zero this core's accumulator block on its first step.
    @pl.when(i == 0)
    def _():
        out_ref[...] = jnp.zeros_like(out_ref)

    tile_idx = c * tiles_per_core + i
    row_start = tile_idx * tile_rows

    n_chunks = tile_rows // chunk_rows
    g = chunk_rows // 8

    def reduce_block(make_valid):
        # Walk the (tile_rows, 128) block in (chunk_rows, 128) sub-slabs so
        # the f32 temporaries stay small; accumulate three (8, 128) partials
        # with pure VPU vreg adds, then fold them into the VMEM-resident
        # output once per grid step.
        def body(k, carry):
            s_d, s_d2, s_n = carry
            r0 = pl.multiple_of(k * chunk_rows, chunk_rows)
            t = target_ref[pl.ds(r0, chunk_rows), :].astype(jnp.float32)
            p = jnp.maximum(
                pred_ref[pl.ds(r0, chunk_rows), :].astype(jnp.float32), 0.001)
            valid = make_valid(t, r0)
            # log(target) - log(pred) fused to log(t/p); invalid -> log(1)=0.
            d = jnp.log(jnp.where(valid, t / p, 1.0))
            v = valid.astype(jnp.float32)
            d3 = d.reshape(g, 8, LANES)
            v3 = v.reshape(g, 8, LANES)
            return (s_d + jnp.sum(d3, axis=0),
                    s_d2 + jnp.sum(d3 * d3, axis=0),
                    s_n + jnp.sum(v3, axis=0))

        z = jnp.zeros((8, LANES), jnp.float32)
        s_d, s_d2, s_n = jax.lax.fori_loop(0, n_chunks, body, (z, z, z))
        out_ref[0:8, :] += s_d      # sum(diff_log)
        out_ref[8:16, :] += s_d2    # sum(diff_log^2)
        out_ref[16:24, :] += s_n    # count(valid)

    # Fast path: every row of this block is in range -> only (target > 0).
    @pl.when(row_start + tile_rows <= rows_total)
    def _():
        reduce_block(lambda t, r0: t > 0.0)

    # Slow path: ragged last tile (or clamped duplicate with a valid prefix)
    # -> also mask rows past the real array.
    @pl.when(jnp.logical_and(row_start + tile_rows > rows_total,
                             row_start < rows_total))
    def _():
        def masked_valid(t, r0):
            row_ids = (row_start + r0
                       + jax.lax.broadcasted_iota(jnp.int32, t.shape, 0))
            return jnp.logical_and(t > 0.0, row_ids < rows_total)
        reduce_block(masked_valid)
    # Fully out-of-range duplicate tiles (row_start >= rows_total) do nothing.


def silog_loss(pred, target, lambd=0.5, tile_rows=4096, num_cores=1):
    """Scale-invariant log loss, equivalent to the PyTorch SiLogLoss.forward.

    Precondition: at least one element with target > 0, otherwise the result
    is NaN (matches the PyTorch reference's 0/0 behavior).
    On v7x pass num_cores=2 to split the reduction across both TensorCores.
    """
    assert pred.shape == target.shape, "pred/target must have the same shape"
    n = math.prod(pred.shape)
    assert n > 0, "empty input"

    pred_flat = jnp.reshape(pred, (-1,))
    target_flat = jnp.reshape(target, (-1,))

    rows = n // LANES
    n_main = rows * LANES
    rem = n - n_main

    # ---- <128-element ragged tail: plain JAX, no padded copy of the input.
    if rem:
        tp = jnp.maximum(pred_flat[n_main:].astype(jnp.float32), 0.001)
        tt = target_flat[n_main:].astype(jnp.float32)
        tv = tt > 0.0
        td = jnp.where(tv, jnp.log(jnp.where(tv, tt, 1.0) / tp), 0.0)
        tail_sum_d = jnp.sum(td)
        tail_sum_d2 = jnp.sum(td * td)
        tail_cnt = jnp.sum(tv.astype(jnp.float32))
    else:
        tail_sum_d = jnp.float32(0.0)
        tail_sum_d2 = jnp.float32(0.0)
        tail_cnt = jnp.float32(0.0)

    if rows == 0:
        sum_d, sum_d2, cnt = tail_sum_d, tail_sum_d2, tail_cnt
    else:
        pred2d = pred_flat[:n_main].reshape(rows, LANES)
        target2d = target_flat[:n_main].reshape(rows, LANES)

        isz_p = jnp.dtype(pred.dtype).itemsize
        isz_t = jnp.dtype(target.dtype).itemsize

        def round_up(a, b):
            return ((a + b - 1) // b) * b

        # Sublane multiple for the most-packed input dtype (8/16/32 rows).
        sub = max(8, 32 // max(1, min(isz_p, isz_t)))
        chunk_base = 512                       # multiple of 8, 16 and 32

        rows_rounded = round_up(rows, sub)
        tr = min(round_up(max(tile_rows, sub), sub), rows_rounded)
        if tr >= chunk_base:
            chunk = chunk_base
            tr = (tr // chunk_base) * chunk_base   # tr is a multiple of chunk
        else:
            chunk = tr

        n_tiles = -(-rows // tr)
        num_splits = max(1, min(int(num_cores), n_tiles))
        tiles_per_core = -(-n_tiles // num_splits)
        grid = (num_splits, tiles_per_core)

        if num_splits == 1:
            def in_index_map(c, i):
                return (i, 0)
            split_sem = "arbitrary"
        else:
            def in_index_map(c, i):
                # Clamp so no block is fully out of bounds; clamped duplicate
                # tiles are neutralized in-kernel via the row-id check.
                return (jnp.minimum(c * tiles_per_core + i, n_tiles - 1), 0)
            # Only CORE_PARALLEL actually shards a grid axis across cores.
            split_sem = getattr(pltpu, "CORE_PARALLEL", "parallel")

        # VMEM budget: double-buffered input blocks + chunked temporaries.
        block_in_bytes = tr * LANES * (isz_p + isz_t)
        vmem_limit = 2 * block_in_bytes + 8 * chunk * LANES * 4 + (4 << 20)
        vmem_limit = min(max(vmem_limit, 32 << 20), 64 << 20)

        cost = pl.CostEstimate(
            flops=10 * n_main,
            transcendentals=n_main,
            bytes_accessed=n_main * (isz_p + isz_t) + num_splits * 24 * LANES * 4,
        )

        partials = pl.pallas_call(
            functools.partial(_silog_partial_kernel, rows, tiles_per_core,
                              tr, chunk),
            out_shape=jax.ShapeDtypeStruct((num_splits * 24, LANES),
                                           jnp.float32),
            grid=grid,
            in_specs=[
                pl.BlockSpec((tr, LANES), in_index_map),
                pl.BlockSpec((tr, LANES), in_index_map),
            ],
            out_specs=pl.BlockSpec((24, LANES), lambda c, i: (c, 0)),
            compiler_params=pltpu.CompilerParams(
                dimension_semantics=(split_sem, "arbitrary"),
                vmem_limit_bytes=int(vmem_limit)),
            cost_estimate=cost,
        )(pred2d, target2d)

        parts = partials.reshape(num_splits, 3, 8, LANES)
        sum_d = jnp.sum(parts[:, 0]) + tail_sum_d
        sum_d2 = jnp.sum(parts[:, 1]) + tail_sum_d2
        cnt = jnp.sum(parts[:, 2]) + tail_cnt

    mean_d = sum_d / cnt
    mean_d2 = sum_d2 / cnt
    # Clamp the variance-like term: FP rounding can push it slightly negative.
    return jnp.sqrt(jnp.maximum(mean_d2 - lambd * mean_d * mean_d, 0.0))


def silog_loss_ref(pred, target, lambd=0.5):
    p = jnp.maximum(pred.astype(jnp.float32), 0.001)
    t = target.astype(jnp.float32)
    valid = t > 0.0
    d = jnp.where(valid, jnp.log(jnp.where(valid, t, 1.0)) - jnp.log(p), 0.0)
    cnt = jnp.sum(valid.astype(jnp.float32))
    mean_d = jnp.sum(d) / cnt
    mean_d2 = jnp.sum(d * d) / cnt
    return jnp.sqrt(mean_d2 - lambd * mean_d * mean_d)


if __name__ == "__main__":
    key = jax.random.PRNGKey(0)

    # Case 1: NCHW depth maps (module's typical small input), numel % 128 == 0.
    kp, kt = jax.random.split(key)
    shape = (2, 4, 16, 16)
    pred = jax.random.uniform(kp, shape, jnp.float32, minval=0.0, maxval=5.0)
    target = jax.random.normal(kt, shape, jnp.float32) * 2.0 + 1.0
    loss = jax.block_until_ready(silog_loss(pred, target, lambd=0.5))
    ref = silog_loss_ref(pred, target, lambd=0.5)
    assert jnp.allclose(loss, ref, rtol=1e-5, atol=1e-6), (loss, ref)

    # Case 2: ragged size (numel % 128 != 0) + tiny tile_rows to exercise the
    # JAX-side tail fold, the masked (ragged-tile) path and small chunks.
    kp2, kt2 = jax.random.split(kp)
    shape2 = (3, 1, 40, 40)
    pred2 = jax.random.uniform(kp2, shape2, jnp.float32, minval=0.0, maxval=5.0)
    target2 = jax.random.normal(kt2, shape2, jnp.float32) * 2.0 + 1.0
    loss2 = jax.block_until_ready(
        silog_loss(pred2, target2, lambd=0.5, tile_rows=8))
    ref2 = silog_loss_ref(pred2, target2, lambd=0.5)
    assert jnp.allclose(loss2, ref2, rtol=1e-5, atol=1e-6), (loss2, ref2)

    # Case 3: default tile_rows — exercises the chunked fori_loop, multiple
    # grid tiles and the fast/masked path split on a medium map.
    kp3, kt3 = jax.random.split(kp2)
    shape3 = (2, 4, 128, 160)
    pred3 = jax.random.uniform(kp3, shape3, jnp.float32, minval=0.0, maxval=5.0)
    target3 = jax.random.normal(kt3, shape3, jnp.float32) * 2.0 + 1.0
    loss3 = jax.block_until_ready(silog_loss(pred3, target3, lambd=0.5))
    ref3 = silog_loss_ref(pred3, target3, lambd=0.5)
    assert jnp.allclose(loss3, ref3, rtol=1e-5, atol=1e-6), (loss3, ref3)

    # Case 4: bf16 inputs — exercises native-dtype streaming with 16-row
    # sublane-aligned blocks.
    kp4, kt4 = jax.random.split(kp3)
    pred4 = jax.random.uniform(kp4, shape, jnp.float32,
                               minval=0.0, maxval=5.0).astype(jnp.bfloat16)
    target4 = (jax.random.normal(kt4, shape, jnp.float32) * 2.0
               + 1.0).astype(jnp.bfloat16)
    loss4 = jax.block_until_ready(silog_loss(pred4, target4, lambd=0.5))
    ref4 = silog_loss_ref(pred4, target4, lambd=0.5)
    assert jnp.allclose(loss4, ref4, rtol=1e-4, atol=1e-5), (loss4, ref4)

    print("KERNEL_OK")
</pallas_src>

<mosaic_0001>
module attributes {stable_mosaic.version = 11 : i64} {
  func.func @_silog_partial_kernel(%arg0: i32, %arg1: i32, %arg2: memref<16x128xf32, #tpu.memory_space<vmem>>, %arg3: memref<16x128xf32, #tpu.memory_space<vmem>>, %arg4: memref<24x128xf32, #tpu.memory_space<vmem>>) attributes {dimension_semantics = [#tpu.dimension_semantics<arbitrary>, #tpu.dimension_semantics<arbitrary>], iteration_bounds = array<i64: 1, 1>, scalar_prefetch = 0 : i64, scratch_operands = 0 : i64, tpu.core_type = #tpu.core_type<tc>, window_params = [{transform_indices = @transform_0, window_bounds = array<i64: 16, 128>}, {transform_indices = @transform_1, window_bounds = array<i64: 16, 128>}, {transform_indices = @transform_2, window_bounds = array<i64: 24, 128>}]} {
    %c0_i32 = arith.constant 0 : i32
    %0 = arith.cmpi eq, %arg1, %c0_i32 : i32
    %1 = arith.extui %0 : i1 to i32
    %c0_i32_0 = arith.constant 0 : i32
    %2 = arith.cmpi ne, %1, %c0_i32_0 : i32
    scf.if %2 {
      %cst = arith.constant 0.000000e+00 : f32
      %16 = vector.broadcast %cst : f32 to vector<24x128xf32>
      %c0 = arith.constant 0 : index
      %c0_8 = arith.constant 0 : index
      %17 = vector.load %arg4[%c0, %c0_8] : memref<24x128xf32, #tpu.memory_space<vmem>>, vector<24x128xf32>
      tpu.vector_store %arg4[%c0, %c0_8], %16 {strides = array<i32>} : memref<24x128xf32, #tpu.memory_space<vmem>>, vector<24x128xf32>,
    } else {
    }
    %c1_i32 = arith.constant 1 : i32
    %3 = arith.muli %arg0, %c1_i32 : i32
    %4 = arith.addi %3, %arg1 : i32
    %c16_i32 = arith.constant 16 : i32
    %5 = arith.muli %4, %c16_i32 : i32
    %c16_i32_1 = arith.constant 16 : i32
    %6 = arith.addi %5, %c16_i32_1 : i32
    %c16_i32_2 = arith.constant 16 : i32
    %7 = arith.cmpi sle, %6, %c16_i32_2 : i32
    %8 = arith.extui %7 : i1 to i32
    %c0_i32_3 = arith.constant 0 : i32
    %9 = arith.cmpi ne, %8, %c0_i32_3 : i32
    scf.if %9 {
      %cst = arith.constant 0.000000e+00 : f32
      %16 = vector.broadcast %cst : f32 to vector<8x128xf32>
      %c0_i32_8 = arith.constant 0 : i32
      %c16_i32_9 = arith.constant 16 : i32
      %17 = arith.muli %c0_i32_8, %c16_i32_9 : i32
      %18 = tpu.assume_multiple %17, 16 : i32
      %19 = arith.index_cast %18 : i32 to index
      %c0 = arith.constant 0 : index
      %20 = vector.load %arg3[%19, %c0] : memref<16x128xf32, #tpu.memory_space<vmem>>, vector<16x128xf32>
      %21 = arith.index_cast %18 : i32 to index
      %c0_10 = arith.constant 0 : index
      %22 = vector.load %arg2[%21, %c0_10] : memref<16x128xf32, #tpu.memory_space<vmem>>, vector<16x128xf32>
      %cst_11 = arith.constant 1.000000e-03 : f32
      %23 = vector.broadcast %cst_11 : f32 to vector<16x128xf32>
      %24 = arith.maximumf %22, %23 : vector<16x128xf32>
      %cst_12 = arith.constant 0.000000e+00 : f32
      %25 = vector.broadcast %cst_12 : f32 to vector<16x128xf32>
      %26 = arith.cmpf ogt, %20, %25 : vector<16x128xf32>
      %27 = arith.divf %20, %24 : vector<16x128xf32>
      %cst_13 = arith.constant 1.000000e+00 : f32
      %28 = vector.broadcast %cst_13 : f32 to vector<16x128xf32>
      %29 = arith.select %26, %27, %28 : vector<16x128xi1>, vector<16x128xf32>
      %30 = math.log %29 : vector<16x128xf32>
      %31 = arith.extui %26 : vector<16x128xi1> to vector<16x128xi32>
      %32 = arith.sitofp %31 : vector<16x128xi32> to vector<16x128xf32>
      %33 = vector.shape_cast %30 : vector<16x128xf32> to vector<2x8x128xf32>
      %34 = vector.shape_cast %32 : vector<16x128xf32> to vector<2x8x128xf32>
      %cst_14 = arith.constant dense<0.000000e+00> : vector<8x128xf32>
      %35 = vector.multi_reduction <add>, %33, %cst_14 [0] : vector<2x8x128xf32> to vector<8x128xf32>
      %36 = arith.addf %16, %35 : vector<8x128xf32>
      %37 = arith.mulf %33, %33 : vector<2x8x128xf32>
      %cst_15 = arith.constant dense<0.000000e+00> : vector<8x128xf32>
      %38 = vector.multi_reduction <add>, %37, %cst_15 [0] : vector<2x8x128xf32> to vector<8x128xf32>
      %39 = arith.addf %16, %38 : vector<8x128xf32>
      %cst_16 = arith.constant dense<0.000000e+00> : vector<8x128xf32>
      %40 = vector.multi_reduction <add>, %34, %cst_16 [0] : vector<2x8x128xf32> to vector<8x128xf32>
      %41 = arith.addf %16, %40 : vector<8x128xf32>
      %c1_i32_17 = arith.constant 1 : i32
      %c0_18 = arith.constant 0 : index
      %c0_19 = arith.constant 0 : index
      %42 = vector.load %arg4[%c0_18, %c0_19] : memref<24x128xf32, #tpu.memory_space<vmem>>, vector<8x128xf32>
      %43 = arith.addf %42, %36 : vector<8x128xf32>
      %c0_20 = arith.constant 0 : index
      %c0_21 = arith.constant 0 : index
      %44 = vector.load %arg4[%c0_20, %c0_21] : memref<24x128xf32, #tpu.memory_space<vmem>>, vector<8x128xf32>
      tpu.vector_store %arg4[%c0_20, %c0_21], %43 {strides = array<i32>} : memref<24x128xf32, #tpu.memory_space<vmem>>, vector<8x128xf32>,
      %c8 = arith.constant 8 : index
      %c0_22 = arith.constant 0 : index
      %45 = vector.load %arg4[%c8, %c0_22] : memref<24x128xf32, #tpu.memory_space<vmem>>, vector<8x128xf32>
      %46 = arith.addf %45, %39 : vector<8x128xf32>
      %c8_23 = arith.constant 8 : index
      %c0_24 = arith.constant 0 : index
      %47 = vector.load %arg4[%c8_23, %c0_24] : memref<24x128xf32, #tpu.memory_space<vmem>>, vector<8x128xf32>
      tpu.vector_store %arg4[%c8_23, %c0_24], %46 {strides = array<i32>} : memref<24x128xf32, #tpu.memory_space<vmem>>, vector<8x128xf32>,
      %c16 = arith.constant 16 : index
      %c0_25 = arith.constant 0 : index
      %48 = vector.load %arg4[%c16, %c0_25] : memref<24x128xf32, #tpu.memory_space<vmem>>, vector<8x128xf32>
      %49 = arith.addf %48, %41 : vector<8x128xf32>
      %c16_26 = arith.constant 16 : index
      %c0_27 = arith.constant 0 : index
      %50 = vector.load %arg4[%c16_26, %c0_27] : memref<24x128xf32, #tpu.memory_space<vmem>>, vector<8x128xf32>
      tpu.vector_store %arg4[%c16_26, %c0_27], %49 {strides = array<i32>} : memref<24x128xf32, #tpu.memory_space<vmem>>, vector<8x128xf32>,
    } else {
    }
    %c16_i32_4 = arith.constant 16 : i32
    %10 = arith.addi %5, %c16_i32_4 : i32
    %c16_i32_5 = arith.constant 16 : i32
    %11 = arith.cmpi sgt, %10, %c16_i32_5 : i32
    %c16_i32_6 = arith.constant 16 : i32
    %12 = arith.cmpi slt, %5, %c16_i32_6 : i32
    %13 = arith.andi %11, %12 : i1
    %14 = arith.extui %13 : i1 to i32
    %c0_i32_7 = arith.constant 0 : i32
    %15 = arith.cmpi ne, %14, %c0_i32_7 : i32
    scf.if %15 {
      %cst = arith.constant 0.000000e+00 : f32
      %16 = vector.broadcast %cst : f32 to vector<8x128xf32>
      %c0_i32_8 = arith.constant 0 : i32
      %c16_i32_9 = arith.constant 16 : i32
      %17 = arith.muli %c0_i32_8, %c16_i32_9 : i32
      %18 = tpu.assume_multiple %17, 16 : i32
      %19 = arith.index_cast %18 : i32 to index
      %c0 = arith.constant 0 : index
      %20 = vector.load %arg3[%19, %c0] : memref<16x128xf32, #tpu.memory_space<vmem>>, vector<16x128xf32>
      %21 = arith.index_cast %18 : i32 to index
      %c0_10 = arith.constant 0 : index
      %22 = vector.load %arg2[%21, %c0_10] : memref<16x128xf32, #tpu.memory_space<vmem>>, vector<16x128xf32>
      %cst_11 = arith.constant 1.000000e-03 : f32
      %23 = vector.broadcast %cst_11 : f32 to vector<16x128xf32>
      %24 = arith.maximumf %22, %23 : vector<16x128xf32>
      %25 = arith.addi %5, %18 : i32
      %26 = tpu.iota {dimensions = array<i32: 0>} : vector<16x128xi32>
      %27 = vector.broadcast %25 : i32 to vector<16x128xi32>
      %28 = arith.addi %27, %26 : vector<16x128xi32>
      %cst_12 = arith.constant 0.000000e+00 : f32
      %29 = vector.broadcast %cst_12 : f32 to vector<16x128xf32>
      %30 = arith.cmpf ogt, %20, %29 : vector<16x128xf32>
      %c16_i32_13 = arith.constant 16 : i32
      %31 = vector.broadcast %c16_i32_13 : i32 to vector<16x128xi32>
      %32 = arith.cmpi slt, %28, %31 : vector<16x128xi32>
      %33 = arith.andi %30, %32 : vector<16x128xi1>
      %34 = arith.divf %20, %24 : vector<16x128xf32>
      %cst_14 = arith.constant 1.000000e+00 : f32
      %35 = vector.broadcast %cst_14 : f32 to vector<16x128xf32>
      %36 = arith.select %33, %34, %35 : vector<16x128xi1>, vector<16x128xf32>
      %37 = math.log %36 : vector<16x128xf32>
      %38 = arith.extui %33 : vector<16x128xi1> to vector<16x128xi32>
      %39 = arith.sitofp %38 : vector<16x128xi32> to vector<16x128xf32>
      %40 = vector.shape_cast %37 : vector<16x128xf32> to vector<2x8x128xf32>
      %41 = vector.shape_cast %39 : vector<16x128xf32> to vector<2x8x128xf32>
      %cst_15 = arith.constant dense<0.000000e+00> : vector<8x128xf32>
      %42 = vector.multi_reduction <add>, %40, %cst_15 [0] : vector<2x8x128xf32> to vector<8x128xf32>
      %43 = arith.addf %16, %42 : vector<8x128xf32>
      %44 = arith.mulf %40, %40 : vector<2x8x128xf32>
      %cst_16 = arith.constant dense<0.000000e+00> : vector<8x128xf32>
      %45 = vector.multi_reduction <add>, %44, %cst_16 [0] : vector<2x8x128xf32> to vector<8x128xf32>
      %46 = arith.addf %16, %45 : vector<8x128xf32>
      %cst_17 = arith.constant dense<0.000000e+00> : vector<8x128xf32>
      %47 = vector.multi_reduction <add>, %41, %cst_17 [0] : vector<2x8x128xf32> to vector<8x128xf32>
      %48 = arith.addf %16, %47 : vector<8x128xf32>
      %c1_i32_18 = arith.constant 1 : i32
      %c0_19 = arith.constant 0 : index
      %c0_20 = arith.constant 0 : index
      %49 = vector.load %arg4[%c0_19, %c0_20] : memref<24x128xf32, #tpu.memory_space<vmem>>, vector<8x128xf32>
      %50 = arith.addf %49, %43 : vector<8x128xf32>
      %c0_21 = arith.constant 0 : index
      %c0_22 = arith.constant 0 : index
      %51 = vector.load %arg4[%c0_21, %c0_22] : memref<24x128xf32, #tpu.memory_space<vmem>>, vector<8x128xf32>
      tpu.vector_store %arg4[%c0_21, %c0_22], %50 {strides = array<i32>} : memref<24x128xf32, #tpu.memory_space<vmem>>, vector<8x128xf32>,
      %c8 = arith.constant 8 : index
      %c0_23 = arith.constant 0 : index
      %52 = vector.load %arg4[%c8, %c0_23] : memref<24x128xf32, #tpu.memory_space<vmem>>, vector<8x128xf32>
      %53 = arith.addf %52, %46 : vector<8x128xf32>
      %c8_24 = arith.constant 8 : index
      %c0_25 = arith.constant 0 : index
      %54 = vector.load %arg4[%c8_24, %c0_25] : memref<24x128xf32, #tpu.memory_space<vmem>>, vector<8x128xf32>
      tpu.vector_store %arg4[%c8_24, %c0_25], %53 {strides = array<i32>} : memref<24x128xf32, #tpu.memory_space<vmem>>, vector<8x128xf32>,
      %c16 = arith.constant 16 : index
      %c0_26 = arith.constant 0 : index
      %55 = vector.load %arg4[%c16, %c0_26] : memref<24x128xf32, #tpu.memory_space<vmem>>, vector<8x128xf32>
      %56 = arith.addf %55, %48 : vector<8x128xf32>
      %c16_27 = arith.constant 16 : index
      %c0_28 = arith.constant 0 : index
      %57 = vector.load %arg4[%c16_27, %c0_28] : memref<24x128xf32, #tpu.memory_space<vmem>>, vector<8x128xf32>
      tpu.vector_store %arg4[%c16_27, %c0_28], %56 {strides = array<i32>} : memref<24x128xf32, #tpu.memory_space<vmem>>, vector<8x128xf32>,
    } else {
    }
    return
  }
  func.func @transform_0(%arg0: i32, %arg1: i32) -> (i32, i32) {
    %c0_i32 = arith.constant 0 : i32
    %c0_i32_0 = arith.constant 0 : i32
    return %arg1, %c0_i32 : i32, i32
  }
  func.func @transform_1(%arg0: i32, %arg1: i32) -> (i32, i32) {
    %c0_i32 = arith.constant 0 : i32
    %c0_i32_0 = arith.constant 0 : i32
    return %arg1, %c0_i32 : i32, i32
  }
  func.func @transform_2(%arg0: i32, %arg1: i32) -> (i32, i32) {
    %c0_i32 = arith.constant 0 : i32
    %c0_i32_0 = arith.constant 0 : i32
    return %arg0, %c0_i32 : i32, i32
  }
}

</mosaic_0001>

<llo_original>
// kernel: tpu_custom_call.1
$region0: #{tpu_custom_call.1}
  #allocation0 [shape = 'u32[]', space=smem, size = 0x4, offset = 0x4, fixed_abs, tag = 'smem constant byte address 0x4 - core index']
  #allocation1 [shape = 'u32[144,128]{1,0:T(1,128)}', space=vmem, size = 0x12000, scoped, tag = 'internal scratch']
  %s0 = inlined_call_operand.hbm [shape: f32[16,128], index: 0, kind: input, shape index: {}]
  %s1 = inlined_call_operand.hbm [shape: f32[16,128], index: 1, kind: input, shape index: {}]
  %s2 = inlined_call_operand.hbm [shape: f32[24,128], index: 2, kind: output, shape index: {}]
  %s3 = sld [smem:[#allocation0]]
  $region38: #{tpu_custom_call.1} parent=0
    _
  %s5 = ssub.s32 1, %s3
  %s6 = scalar_select 0, %s5, %s3
  $region1: #{tpu_custom_call.1} parent=0
    #allocation2 [shape = 'u8[8192]{0}', space=vmem, size = 0x2000, scoped, tag = 'input window, operand 0, single buffered']
    #allocation3 [shape = 's32[1]{0}', space=sflag, size = 0x4, scoped, tag = 'scoped memory for tpu_custom_call.1']
    #allocation4 [shape = 's32[1]{0}', space=sflag, size = 0x4, scoped, tag = 'scoped memory for tpu_custom_call.1']
    #allocation5 [shape = 'u8[8192]{0}', space=vmem, size = 0x2000, scoped, tag = 'input window, operand 1, single buffered']
    #allocation6 [shape = 's32[1]{0}', space=sflag, size = 0x4, scoped, tag = 'scoped memory for tpu_custom_call.1']
    #allocation7 [shape = 'u8[12288]{0}', space=vmem, size = 0x3000, scoped, tag = 'output window, operand 0, single buffered']
    %7 = vsyncpa [#allocation3], 0
    %8 = vsyncpa [#allocation6], 0
    %9 = vsyncpa [#allocation4], 0
    // Predicated region
    $region2: #{tpu_custom_call.1} parent=1 // pred_check
      _
    $region3: #{tpu_custom_call.1} parent=1 // pred_check_branch
      %11 = sbr.rel (0) target = $region5
    $region4: #{tpu_custom_call.1} parent=1 // pred_region
      %s13 = ssub.s32 256, 256
      %14 = vsyncadd [#allocation3], %s13
      %s15 = sshll.u32 [#allocation2], 4
      %s16 = int_to_ptr.vmem [resolvable:$true] %s15
      %21 = dma.hbm_to_vmem [thread:$0]  %s0, 256, %s16, [#allocation3], 128, 128, 8
    $region5: #{tpu_custom_call.1} parent=1 // pred_fallthru
      _
    // Predicated region
    $region6: #{tpu_custom_call.1} parent=1 // pred_check
      _
    $region7: #{tpu_custom_call.1} parent=1 // pred_check_branch
      %23 = sbr.rel (0) target = $region9
    $region8: #{tpu_custom_call.1} parent=1 // pred_region
      %s25 = ssub.s32 256, 256
      %26 = vsyncadd [#allocation6], %s25
      %s27 = sshll.u32 [#allocation5], 4
      %s28 = int_to_ptr.vmem [resolvable:$true] %s27
      %33 = dma.hbm_to_vmem [thread:$0]  %s1, 256, %s28, [#allocation6], 128, 128, 8
    $region9: #{tpu_custom_call.1} parent=1 // pred_fallthru
      _
    // Predicated region
    $region10: #{tpu_custom_call.1} parent=1 // pred_check
      _
    $region11: #{tpu_custom_call.1} parent=1 // pred_check_branch
      %35 = sbr.rel (0) target = $region13
    $region12: #{tpu_custom_call.1} parent=1 // pred_region
      %36 = dma.done [#allocation3], 256
    $region13: #{tpu_custom_call.1} parent=1 // pred_fallthru
      _
    // Predicated region
    $region14: #{tpu_custom_call.1} parent=1 // pred_check
      _
    $region15: #{tpu_custom_call.1} parent=1 // pred_check_branch
      %38 = sbr.rel (0) target = $region17
    $region16: #{tpu_custom_call.1} parent=1 // pred_region
      %39 = dma.done [#allocation6], 256
    $region17: #{tpu_custom_call.1} parent=1 // pred_fallthru
      _
    %p40 = scmp.eq.s32.totalorder 0, 0
    // Predicated region
    $region18: #{tpu_custom_call.1} parent=1 // pred_check
      %p41 = pneg %p40
    $region19: #{tpu_custom_call.1} parent=1 // pred_check_branch
      %43 = sbr.rel (%p41) target = $region21
    $region20: #{tpu_custom_call.1} parent=1 // pred_region
      %44 = vst [vmem:[#allocation7] sm:$0xff] 0.0
      %45 = vst [vmem:[#allocation7 + $0x8] sm:$0xff] 0.0
      %46 = vst [vmem:[#allocation7 + $0x10] sm:$0xff] 0.0
    $region21: #{tpu_custom_call.1} parent=1 // pred_fallthru
      _
    %s47 = sadd.s32 0, 0
    %s48 = smul.u32 %s47, 16
    %s49 = sadd.s32 %s48, 16
    %p50 = scmp.le.s32.totalorder %s49, 16
    // Predicated region
    $region22: #{tpu_custom_call.1} parent=1 // pred_check
      %p51 = pneg %p50
    $region23: #{tpu_custom_call.1} parent=1 // pred_check_branch
      %53 = sbr.rel (%p51) target = $region25
    $region24: #{tpu_custom_call.1} parent=1 // pred_region
      %v54 = vld [vmem:[#allocation5] sm:$0xff]
      %v55 = vld [vmem:[#allocation5 + $0x8] sm:$0xff]
      %v56 = vld [vmem:[#allocation2] sm:$0xff]
      %v57 = vld [vmem:[#allocation2 + $0x8] sm:$0xff]
      %v58 = vmax.f32 %v56, 0.001
      %v59 = vmax.f32 %v57, 0.001
      %vm60 = vcmp.gt.f32.partialorder %v54, 0.0
      %vm61 = vcmp.gt.f32.partialorder %v55, 0.0
      %v62 = vrcp.pop %v58
      %v63 = vmul.f32 %v54, %v62
      %v64 = vrcp.pop %v59
      %v65 = vmul.f32 %v55, %v64
      %v66 = vsel %vm60, %v63, 1.0
      %v67 = vsel %vm61, %v65, 1.0
      %v68 = vlog2.pop %v66
      %v69 = vmul.f32 %v68, 0.6931472
      %v70 = vlog2.pop %v67
      %v71 = vmul.f32 %v70, 0.6931472
      %v72 = vsel %vm60, 1, 0
      %v73 = vsel %vm61, 1, 0
      %v74 = vcvt.s32.f32 %v72
      %v75 = vcvt.s32.f32 %v73
      %v76 = vadd.f32 %v69, %v71
      %v77 = vadd.f32 %v76, 0.0
      %v78 = vmul.f32 %v69, %v69
      %v79 = vmul.f32 %v71, %v71
      %v80 = vadd.f32 %v78, %v79
      %v81 = vadd.f32 %v80, 0.0
      %v82 = vadd.f32 %v74, %v75
      %v83 = vadd.f32 %v82, 0.0
      %v84 = vld [vmem:[#allocation7] sm:$0xff]
      %v85 = vadd.f32 %v84, %v77
      %86 = vst [vmem:[#allocation7] sm:$0xff] %v85
      %v87 = vld [vmem:[#allocation7 + $0x8] sm:$0xff]
      %v88 = vadd.f32 %v87, %v81
      %89 = vst [vmem:[#allocation7 + $0x8] sm:$0xff] %v88
      %v90 = vld [vmem:[#allocation7 + $0x10] sm:$0xff]
      %v91 = vadd.f32 %v90, %v83
      %92 = vst [vmem:[#allocation7 + $0x10] sm:$0xff] %v91
    $region25: #{tpu_custom_call.1} parent=1 // pred_fallthru
      _
    %p93 = scmp.gt.s32.totalorder %s49, 16
    %p94 = scmp.lt.s32.totalorder %s48, 16
    %p95 = pnand %p93, %p94
    %p96 = pneg %p95
    // Predicated region
    $region26: #{tpu_custom_call.1} parent=1 // pred_check
      _
    $region27: #{tpu_custom_call.1} parent=1 // pred_check_branch
      %98 = sbr.rel (%p95) target = $region29
    $region28: #{tpu_custom_call.1} parent=1 // pred_region
      %v99 = vld [vmem:[#allocation5] sm:$0xff]
      %v100 = vld [vmem:[#allocation5 + $0x8] sm:$0xff]
      %v101 = vld [vmem:[#allocation2] sm:$0xff]
      %v102 = vld [vmem:[#allocation2 + $0x8] sm:$0xff]
      %v103 = vmax.f32 %v101, 0.001
      %v104 = vmax.f32 %v102, 0.001
      %s105 = sadd.s32 %s48, 0
      %v106 = vlaneseq
      %v107 = vshrl.u32 %v106, 7
      %v108 = vadd.s32 %v107, 8
      %v109 = vstv %s105
      %v110 = vadd.s32 %v109, %v107
      %v111 = vadd.s32 %v109, %v108
      %vm112 = vcmp.gt.f32.partialorder %v99, 0.0
      %vm113 = vcmp.gt.f32.partialorder %v100, 0.0
      %vm114 = vcmp.lt.s32.totalorder %v110, 16
      %vm115 = vcmp.lt.s32.totalorder %v111, 16
      %vm116 = vmand %vm112, %vm114
      %vm117 = vmand %vm113, %vm115
      %v118 = vrcp.pop %v103
      %v119 = vmul.f32 %v99, %v118
      %v120 = vrcp.pop %v104
      %v121 = vmul.f32 %v100, %v120
      %v122 = vsel %vm116, %v119, 1.0
      %v123 = vsel %vm117, %v121, 1.0
      %v124 = vlog2.pop %v122
      %v125 = vmul.f32 %v124, 0.6931472
      %v126 = vlog2.pop %v123
      %v127 = vmul.f32 %v126, 0.6931472
      %v128 = vsel %vm116, 1, 0
      %v129 = vsel %vm117, 1, 0
      %v130 = vcvt.s32.f32 %v128
      %v131 = vcvt.s32.f32 %v129
      %v132 = vadd.f32 %v125, %v127
      %v133 = vadd.f32 %v132, 0.0
      %v134 = vmul.f32 %v125, %v125
      %v135 = vmul.f32 %v127, %v127
      %v136 = vadd.f32 %v134, %v135
      %v137 = vadd.f32 %v136, 0.0
      %v138 = vadd.f32 %v130, %v131
      %v139 = vadd.f32 %v138, 0.0
      %v140 = vld [vmem:[#allocation7] sm:$0xff]
      %v141 = vadd.f32 %v140, %v133
      %142 = vst [vmem:[#allocation7] sm:$0xff] %v141
      %v143 = vld [vmem:[#allocation7 + $0x8] sm:$0xff]
      %v144 = vadd.f32 %v143, %v137
      %145 = vst [vmem:[#allocation7 + $0x8] sm:$0xff] %v144
      %v146 = vld [vmem:[#allocation7 + $0x10] sm:$0xff]
      %v147 = vadd.f32 %v146, %v139
      %148 = vst [vmem:[#allocation7 + $0x10] sm:$0xff] %v147
    $region29: #{tpu_custom_call.1} parent=1 // pred_fallthru
      _
    // Predicated region
    $region30: #{tpu_custom_call.1} parent=1 // pred_check
      _
    $region31: #{tpu_custom_call.1} parent=1 // pred_check_branch
      %150 = sbr.rel (0) target = $region33
    $region32: #{tpu_custom_call.1} parent=1 // pred_region
      %s152 = ssub.s32 384, 384
      %153 = vsyncadd [#allocation4], %s152
      %s154 = sshll.u32 [#allocation7], 4
      %s155 = int_to_ptr.vmem [resolvable:$true] %s154
      %160 = dma.vmem_to_hbm [thread:$0]  %s155, 384, %s2, [#allocation4], 128, 128, 8
    $region33: #{tpu_custom_call.1} parent=1 // pred_fallthru
      _
    // Predicated region
    $region34: #{tpu_custom_call.1} parent=1 // pred_check
      _
    $region35: #{tpu_custom_call.1} parent=1 // pred_check_branch
      %162 = sbr.rel (0) target = $region37
    $region36: #{tpu_custom_call.1} parent=1 // pred_region
      %163 = dma.done [#allocation4], 384
    $region37: #{tpu_custom_call.1} parent=1 // pred_fallthru
      _
    %164 = vsyncpa [#allocation3], 1
    %165 = vsyncpa [#allocation6], 1
    %166 = vsyncpa [#allocation4], 1

</llo_original>
